<compile_context>
chip_gen: v7x
topology: tpu7x:2x2x1
jax: 0.10.0
libtpu: 0.0.40
codegen_flags: <defaults>
</compile_context>

<pallas_src>
import functools

import jax
import jax.numpy as jnp
from jax.experimental import pallas as pl
from jax.experimental.pallas import tpu as pltpu

ACT_NONE, ACT_RELU, ACT_LEAKY = 0, 1, 2


def _round_up(x, m):
    return (x + m - 1) // m * m


# ----------------------------- Pallas kernel ------------------------------ #
def _fused_matmul_kernel(a_ref, w_ref, shift_ref, o_ref, acc_ref, *, act):
    k = pl.program_id(2)

    @pl.when(k == 0)
    def _():
        acc_ref[...] = jnp.zeros_like(acc_ref)

    # bf16 x bf16 -> f32 accumulation on the MXU.
    acc_ref[...] += jnp.dot(a_ref[...], w_ref[...],
                            preferred_element_type=jnp.float32)

    @pl.when(k == pl.num_programs(2) - 1)
    def _():
        y = acc_ref[...] + shift_ref[...]          # BN scale already in weights
        if act == ACT_RELU:
            y = jnp.maximum(y, 0.0)
        elif act == ACT_LEAKY:
            y = jnp.where(y > 0.0, y, 0.2 * y)
        o_ref[...] = y.astype(o_ref.dtype)


# --------------------- per-generation VMEM configuration ------------------- #
_VMEM_CFG = None


def _vmem_config():
    """(tile working-set budget, vmem_limit_bytes) branched on physical VMEM."""
    global _VMEM_CFG
    if _VMEM_CFG is None:
        try:
            cap = int(getattr(pltpu.get_tpu_info(), "vmem_capacity_bytes", 64 << 20))
        except Exception:
            cap = 64 << 20
        if cap >= (96 << 20):            # v5e / v6e: 128 MiB physical VMEM
            _VMEM_CFG = (56 << 20, 100 << 20)
        elif cap >= (48 << 20):          # v7x-class: 64 MiB physical VMEM
            _VMEM_CFG = (26 << 20, 48 << 20)
        else:                            # unknown / emulated: stay conservative
            _VMEM_CFG = (12 << 20, 32 << 20)
    return _VMEM_CFG


# -------------------------- traffic-aware tile picker ---------------------- #
def _pick_tiles(M, Kp, Np, out_bytes, budget):
    """Pick (tm, tn, tk) minimizing HBM traffic:
         A re-streamed once per N tile + W re-streamed once per M tile
         + output + M-tile padding waste + ~0.3 MB-equivalent per grid step,
       subject to a double-buffered VMEM working-set budget."""
    m_ceil = _round_up(M, 16)                           # bf16 sublane packing
    tm_cands = sorted({min(t, m_ceil) for t in
                       (16, 32, 64, 128, 256, 512, 768, 1024,
                        1536, 2048, 3072, 4096, m_ceil)})
    tn_cands = [t for t in range(128, Np + 1, 128) if Np % t == 0]
    tk_cands = [t for t in range(128, Kp + 1, 128) if Kp % t == 0]

    best, best_cfg = None, (16, 128, 128)
    for tm in tm_cands:
        gm = -(-M // tm)
        for tn in tn_cands:
            gn = Np // tn
            for tk in tk_cands:
                gk = Kp // tk
                vmem = (2 * (tm * tk + tk * tn) * 2     # A + W tiles, bf16, 2x buffered
                        + tm * tn * 4                   # f32 accumulator scratch
                        + 2 * tm * tn * out_bytes       # output tile, 2x buffered
                        + 2 * tn * 4)                   # shift tile
                if vmem > budget:
                    continue
                traffic = (M * Kp * 2 * gn              # A streamed once per N tile
                           + Kp * Np * 2 * gm           # W streamed once per M tile
                           + M * Np * out_bytes         # output written once
                           + (gm * tm - M) * Kp * 2     # wasted work on padded rows
                           + gm * gn * gk * 300_000)    # ~0.35us/step grid overhead
                key = (traffic, -tn, -tk)
                if best is None or key < best:
                    best, best_cfg = key, (tm, tn, tk)
    tm, tn, tk = best_cfg
    # Megacore (v7x): guarantee >= 2 parallel output tiles when the extra A
    # re-read is cheap (weight-streaming-bound layers, M <= Np); ~free on 1-TC.
    if (-(-M // tm)) * (Np // tn) == 1 and tn % 256 == 0 and M <= Np:
        tn //= 2
    return tm, tn, tk


# ------------------------------ fused matmul ------------------------------- #
def fused_matmul(a, w_padded, shift_padded, *, act, out_dtype, n_valid):
    """act(a @ w_padded + shift).  `a` must already have its K dim zero-padded
    to w_padded.shape[0]; the M axis may be ragged (clipped edge tile)."""
    M, Kp = a.shape
    Kp2, Np = w_padded.shape
    assert Kp == Kp2 and Kp % 128 == 0 and Np % 128 == 0

    budget, vmem_limit = _vmem_config()
    out_bytes = jnp.dtype(out_dtype).itemsize
    tm, tn, tk = _pick_tiles(M, Kp, Np, out_bytes, budget)
    gm, gn, gk = -(-M // tm), Np // tn, Kp // tk

    a = a.astype(jnp.bfloat16)

    out = pl.pallas_call(
        functools.partial(_fused_matmul_kernel, act=act),
        out_shape=jax.ShapeDtypeStruct((M, Np), out_dtype),
        grid_spec=pltpu.PrefetchScalarGridSpec(
            num_scalar_prefetch=0,
            grid=(gm, gn, gk),
            in_specs=[
                pl.BlockSpec((tm, tk), lambda i, j, k: (i, k)),
                pl.BlockSpec((tk, tn), lambda i, j, k: (k, j)),
                pl.BlockSpec((1, tn), lambda i, j, k: (0, j)),
            ],
            out_specs=pl.BlockSpec((tm, tn), lambda i, j, k: (i, j)),
            scratch_shapes=[pltpu.VMEM((tm, tn), jnp.float32)],
        ),
        compiler_params=pltpu.CompilerParams(
            dimension_semantics=("parallel", "parallel", "arbitrary"),
            vmem_limit_bytes=vmem_limit),
    )(a, w_padded, shift_padded)
    if n_valid != Np:
        out = out[:, :n_valid]
    return out


# ------------------------------ conv wrappers ------------------------------ #
def _im2col(x, kh, kw, stride, k_pad):
    """Conv patches; K layout = (ki*kw + kj)*C + c, with `k_pad` zero columns
    appended so the GEMM K dim is pre-padded (no extra jnp.pad copy)."""
    # TODO(synk): implicit-GEMM (halo-windowed blocks / manual DMA) would avoid
    # materializing the kh*kw-duplicated patches in HBM entirely.
    N, H, W, C = x.shape
    Ho = (H - kh) // stride + 1
    Wo = (W - kw) // stride + 1
    cols = [x[:, i:i + stride * Ho:stride, j:j + stride * Wo:stride, :]
            for i in range(kh) for j in range(kw)]
    if k_pad:
        cols.append(jnp.zeros((N, Ho, Wo, k_pad), x.dtype))
    patches = jnp.concatenate(cols, axis=-1)
    return patches.reshape(N * Ho * Wo, kh * kw * C + k_pad), (N, Ho, Wo)


def conv2d(x, p, *, ksz, stride, padding, cout, act, out_dtype=jnp.bfloat16):
    w2d, shift = p["w2d"], p["shift"]
    x = x.astype(jnp.bfloat16)
    if padding:
        x = jnp.pad(x, ((0, 0), (padding, padding), (padding, padding), (0, 0)))
    k_pad = w2d.shape[0] - ksz * ksz * x.shape[-1]
    patches, (N, Ho, Wo) = _im2col(x, ksz, ksz, stride, k_pad)
    out = fused_matmul(patches, w2d, shift, act=act,
                       out_dtype=out_dtype, n_valid=cout)
    return out.reshape(N, Ho, Wo, cout)


def conv_transpose2d(x, p, *, cout, act, out_dtype=jnp.bfloat16):
    # ConvTranspose2d(k=4, s=2, p=1) via 4-phase sub-pixel decomposition: one
    # 2x2/stride-1 im2col of x (padded by 1) feeds one GEMM whose packed
    # columns hold the 4 output parities in reversed order, so the interleave
    # is a single reshape+transpose+crop.
    N, H, W, C = x.shape
    w2d, shift = p["w2d"], p["shift"]
    xp = jnp.pad(x.astype(jnp.bfloat16), ((0, 0), (1, 1), (1, 1), (0, 0)))
    k_pad = w2d.shape[0] - 4 * C
    patches, (_, Hp, Wp) = _im2col(xp, 2, 2, 1, k_pad)           # Hp=H+1, Wp=W+1
    out = fused_matmul(patches, w2d, shift, act=act,
                       out_dtype=out_dtype, n_valid=4 * cout)
    out = out.reshape(N, Hp, Wp, 2, 2, cout)
    out = jnp.transpose(out, (0, 1, 3, 2, 4, 5)).reshape(N, 2 * Hp, 2 * Wp, cout)
    return out[:, 1:2 * H + 1, 1:2 * W + 1, :]


# ------------------------------- parameters -------------------------------- #
def _pack(w2d, shift):
    K, Nc = w2d.shape
    Kp, Np = _round_up(K, 128), _round_up(Nc, 128)
    w2d = jnp.pad(w2d, ((0, Kp - K), (0, Np - Nc))).astype(jnp.bfloat16)
    shift = jnp.pad(shift, (0, Np - Nc)).reshape(1, Np).astype(jnp.float32)
    return w2d, shift


def _bn_fold(cout, bias, with_bn, kg, kbe):
    if with_bn:
        gamma = 1.0 + 0.1 * jax.random.normal(kg, (cout,), jnp.float32)
        beta = 0.1 * jax.random.normal(kbe, (cout,), jnp.float32)
        mean = jnp.zeros((cout,), jnp.float32)
        var = jnp.ones((cout,), jnp.float32)
        inv = gamma / jnp.sqrt(var + 1e-5)
        return inv, beta + inv * (bias - mean)
    return jnp.ones((cout,), jnp.float32), bias


def make_conv_params(key, cin, cout, ksz, with_bn=True):
    kw_, kb, kg, kbe = jax.random.split(key, 4)
    fan_in = cin * ksz * ksz
    w = jax.random.normal(kw_, (cout, cin, ksz, ksz), jnp.float32) / jnp.sqrt(fan_in)
    bias = 0.01 * jax.random.normal(kb, (cout,), jnp.float32)
    scale, shift = _bn_fold(cout, bias, with_bn, kg, kbe)
    # im2col weight layout: [(ki*kw+kj)*cin + ci, co]; BN scale folded in.
    w2d = (jnp.transpose(w, (2, 3, 1, 0)).reshape(ksz * ksz * cin, cout)
           * scale[None, :])
    w2d_p, shift_p = _pack(w2d, shift)
    return {"w2d": w2d_p, "shift": shift_p}, {"w": w, "scale": scale, "shift": shift}


def make_convT_params(key, cin, cout):
    kw_, kb, kg, kbe = jax.random.split(key, 4)
    ksz = 4
    fan_in = cin * ksz * ksz
    w = jax.random.normal(kw_, (cin, cout, ksz, ksz), jnp.float32) / jnp.sqrt(fan_in)
    bias = 0.01 * jax.random.normal(kb, (cout,), jnp.float32)
    scale, shift = _bn_fold(cout, bias, True, kg, kbe)
    # Sub-pixel packing: output parity (a,b) is a 2x2/stride-1 conv with taps
    # W_t[ci, co, 3-a-2*di, 3-b-2*dj].  Rows = (di*2+dj)*cin + ci (im2col
    # order); columns packed in REVERSED parity order ((1,1),(1,0),(0,1),(0,0))
    # so the runtime interleave is a plain reshape+transpose+crop.
    row_blocks = []
    for di in range(2):
        for dj in range(2):
            col_blocks = []
            for a in (1, 0):
                for b in (1, 0):
                    sub = w[:, :, 3 - a - 2 * di, 3 - b - 2 * dj]   # (cin, cout)
                    col_blocks.append(sub * scale[None, :])
            row_blocks.append(jnp.concatenate(col_blocks, axis=1))  # (cin, 4*cout)
    w2d = jnp.concatenate(row_blocks, axis=0)                       # (4*cin, 4*cout)
    w2d_p, shift_p = _pack(w2d, jnp.tile(shift, 4))
    return {"w2d": w2d_p, "shift": shift_p}, {"w": w, "scale": scale, "shift": shift}


def init_params(key, n_channels, n_classes):
    keys = iter(jax.random.split(key, 32))
    p = {}
    p["down1"], _ = make_conv_params(next(keys), n_channels, 256, 4)
    p["down2"], _ = make_conv_params(next(keys), 256, 256, 4)
    p["down3"], _ = make_conv_params(next(keys), 256, 256, 4)
    p["down4"], _ = make_conv_params(next(keys), 256, 512, 4)
    p["down5"], _ = make_conv_params(next(keys), 512, 512, 4)
    p["down6"], _ = make_conv_params(next(keys), 512, 512, 4)
    p["up1"], _ = make_convT_params(next(keys), 512, 512)
    p["up2"], _ = make_convT_params(next(keys), 1024, 512)
    p["up3"], _ = make_convT_params(next(keys), 1024, 512)
    p["up4"], _ = make_convT_params(next(keys), 768, 256)
    p["up5"], _ = make_convT_params(next(keys), 512, 256)
    p["up6"], _ = make_convT_params(next(keys), 512, 256)
    p["conv1_0"], _ = make_conv_params(next(keys), n_channels + 256, 128, 3)
    p["conv1_1"], _ = make_conv_params(next(keys), 128, 64, 3)
    p["conv1_2"], _ = make_conv_params(next(keys), 64, 32, 3)
    p["outc"], _ = make_conv_params(next(keys), 32, n_classes, 1, with_bn=False)
    return p


# -------------------------------- forward ---------------------------------- #
def invnet_forward(params, x_nchw, *, n_classes):
    # NOTE: all structural ints below are static Python values (never traced).
    x = jnp.transpose(x_nchw, (0, 2, 3, 1)).astype(jnp.bfloat16)   # -> NHWC bf16

    def down(name, cout, h):
        return conv2d(h, params[name], ksz=4, stride=2, padding=1,
                      cout=cout, act=ACT_LEAKY)

    def up(name, cout, h, skip):
        y = conv_transpose2d(h, params[name], cout=cout, act=ACT_RELU)
        # TODO(synk): the skip concat still materializes (y||skip); it could be
        # folded into the next GEMM as two K-range partial matmuls.
        return jnp.concatenate([y, skip], axis=-1)   # == torch.cat(..., dim=1)

    x1 = down("down1", 256, x)
    x2 = down("down2", 256, x1)
    x3 = down("down3", 256, x2)
    x4 = down("down4", 512, x3)
    x5 = down("down5", 512, x4)
    x6 = down("down6", 512, x5)

    h = up("up1", 512, x6, x5)
    h = up("up2", 512, h, x4)
    h = up("up3", 512, h, x3)
    h = up("up4", 256, h, x2)
    h = up("up5", 256, h, x1)
    h = up("up6", 256, h, x)

    for name, cout in (("conv1_0", 128), ("conv1_1", 64), ("conv1_2", 32)):
        h = conv2d(h, params[name], ksz=3, stride=1, padding=1,
                   cout=cout, act=ACT_RELU)

    out = conv2d(h, params["outc"], ksz=1, stride=1, padding=0,
                 cout=n_classes, act=ACT_NONE, out_dtype=jnp.float32)
    return jnp.transpose(out, (0, 3, 1, 2))   # -> NCHW


# ------------------------------- self test ---------------------------------- #
def _self_test():
    """Validate conv / convT packing + Pallas GEMM vs lax references
    (same bf16 operands, f32 accumulation)."""
    key = jax.random.PRNGKey(42)
    k1, k2, k3, kx1, kx2, kx3 = jax.random.split(key, 6)

    def check(got, ref, tag):
        got = jnp.asarray(got, jnp.float32)
        ref = jnp.asarray(ref, jnp.float32)
        err = float(jnp.max(jnp.abs(got - ref)))
        tol = 0.05 * max(1.0, float(jnp.max(jnp.abs(ref))))
        assert err <= tol, f"{tag}: max err {err} > tol {tol}"

    dn = ("NHWC", "HWIO", "NHWC")

    # Down block: Conv2d 4x4/s2/p1 + BN + LeakyReLU(0.2)
    layer, raw = make_conv_params(k1, 8, 32, 4)
    x = jax.random.normal(kx1, (2, 8, 8, 8), jnp.float32).astype(jnp.bfloat16)
    got = conv2d(x, layer, ksz=4, stride=2, padding=1, cout=32, act=ACT_LEAKY)
    w_hwio = (jnp.transpose(raw["w"], (2, 3, 1, 0)) * raw["scale"]).astype(jnp.bfloat16)
    ref = jax.lax.conv_general_dilated(
        x, w_hwio, (2, 2), ((1, 1), (1, 1)), dimension_numbers=dn,
        preferred_element_type=jnp.float32) + raw["shift"]
    check(got, jnp.where(ref > 0, ref, 0.2 * ref), "conv 4x4/s2")

    # TripleConv block: Conv2d 3x3/s1/p1 + BN + ReLU
    layer, raw = make_conv_params(k2, 16, 24, 3)
    x = jax.random.normal(kx2, (1, 8, 8, 16), jnp.float32).astype(jnp.bfloat16)
    got = conv2d(x, layer, ksz=3, stride=1, padding=1, cout=24, act=ACT_RELU)
    w_hwio = (jnp.transpose(raw["w"], (2, 3, 1, 0)) * raw["scale"]).astype(jnp.bfloat16)
    ref = jax.lax.conv_general_dilated(
        x, w_hwio, (1, 1), ((1, 1), (1, 1)), dimension_numbers=dn,
        preferred_element_type=jnp.float32) + raw["shift"]
    check(got, jnp.maximum(ref, 0.0), "conv 3x3/s1")

    # Up block: ConvTranspose2d 4x4/s2/p1 + BN + ReLU
    layer, raw = make_convT_params(k3, 8, 16)
    x = jax.random.normal(kx3, (1, 5, 5, 8), jnp.float32).astype(jnp.bfloat16)
    got = conv_transpose2d(x, layer, cout=16, act=ACT_RELU)
    w_s = raw["w"] * raw["scale"][None, :, None, None]           # (cin,cout,kh,kw)
    wf_hwio = jnp.transpose(w_s[:, :, ::-1, ::-1], (2, 3, 0, 1)).astype(jnp.bfloat16)
    ref = jax.lax.conv_general_dilated(
        x, wf_hwio, (1, 1), ((2, 2), (2, 2)), lhs_dilation=(2, 2),
        dimension_numbers=dn, preferred_element_type=jnp.float32) + raw["shift"]
    check(got, jnp.maximum(ref, 0.0), "convT 4x4/s2")


# ---------------------------------- main ------------------------------------ #
if __name__ == "__main__":
    _self_test()

    n_channels, n_classes = 4, 3
    B, H, W = 2, 64, 64  # 64 is the minimum spatial size for six stride-2 downs

    key = jax.random.PRNGKey(0)
    kp, kx = jax.random.split(key)
    params = init_params(kp, n_channels, n_classes)
    x = jax.random.normal(kx, (B, n_channels, H, W), jnp.float32)

    fwd = jax.jit(functools.partial(invnet_forward, n_classes=n_classes))
    out = jax.block_until_ready(fwd(params, x))

    assert out.shape == (B, n_classes, H, W), out.shape
    assert bool(jnp.all(jnp.isfinite(out)))
    print("KERNEL_OK")
</pallas_src>

<mosaic_0001>
module attributes {stable_mosaic.version = 11 : i64} {
  func.func @_fused_matmul_kernel(%arg0: i32, %arg1: i32, %arg2: i32, %arg3: memref<32x128xbf16, #tpu.memory_space<vmem>>, %arg4: memref<128x128xbf16, #tpu.memory_space<vmem>>, %arg5: memref<1x128xf32, #tpu.memory_space<vmem>>, %arg6: memref<32x128xbf16, #tpu.memory_space<vmem>>, %arg7: memref<32x128xf32, #tpu.memory_space<vmem>>) attributes {dimension_semantics = [#tpu.dimension_semantics<parallel>, #tpu.dimension_semantics<parallel>, #tpu.dimension_semantics<arbitrary>], iteration_bounds = array<i64: 1, 1, 1>, scalar_prefetch = 0 : i64, scratch_operands = 1 : i64, tpu.core_type = #tpu.core_type<tc>, window_params = [{transform_indices = @transform_0, window_bounds = array<i64: 32, 128>}, {transform_indices = @transform_1, window_bounds = array<i64: 128, 128>}, {transform_indices = @transform_2, window_bounds = array<i64: 1, 128>}, {transform_indices = @transform_3, window_bounds = array<i64: 32, 128>}]} {
    %c0_i32 = arith.constant 0 : i32
    %0 = arith.cmpi eq, %arg2, %c0_i32 : i32
    %1 = arith.extui %0 : i1 to i32
    %c0_i32_0 = arith.constant 0 : i32
    %2 = arith.cmpi ne, %1, %c0_i32_0 : i32
    scf.if %2 {
      %cst_10 = arith.constant 0.000000e+00 : f32
      %12 = vector.broadcast %cst_10 : f32 to vector<32x128xf32>
      %c0_11 = arith.constant 0 : index
      %c0_12 = arith.constant 0 : index
      %13 = vector.load %arg7[%c0_11, %c0_12] : memref<32x128xf32, #tpu.memory_space<vmem>>, vector<32x128xf32>
      tpu.vector_store %arg7[%c0_11, %c0_12], %12 {strides = array<i32>} : memref<32x128xf32, #tpu.memory_space<vmem>>, vector<32x128xf32>,
    } else {
    }
    %c0 = arith.constant 0 : index
    %c0_1 = arith.constant 0 : index
    %3 = vector.load %arg7[%c0, %c0_1] : memref<32x128xf32, #tpu.memory_space<vmem>>, vector<32x128xf32>
    %c0_2 = arith.constant 0 : index
    %c0_3 = arith.constant 0 : index
    %4 = vector.load %arg3[%c0_2, %c0_3] : memref<32x128xbf16, #tpu.memory_space<vmem>>, vector<32x128xbf16>
    %c0_4 = arith.constant 0 : index
    %c0_5 = arith.constant 0 : index
    %5 = vector.load %arg4[%c0_4, %c0_5] : memref<128x128xbf16, #tpu.memory_space<vmem>>, vector<128x128xbf16>
    %cst = arith.constant dense<0.000000e+00> : vector<32x128xf32>
    %6 = tpu.matmul %4, %5, %cst {dimension_numbers = #tpu.dot_dimension_numbers<[1], [0], [0], [1], [0, 0, 1, 1], [], []>} : vector<32x128xbf16>, vector<128x128xbf16>, vector<32x128xf32> -> vector<32x128xf32>
    %7 = arith.addf %3, %6 : vector<32x128xf32>
    %c0_6 = arith.constant 0 : index
    %c0_7 = arith.constant 0 : index
    %8 = vector.load %arg7[%c0_6, %c0_7] : memref<32x128xf32, #tpu.memory_space<vmem>>, vector<32x128xf32>
    tpu.vector_store %arg7[%c0_6, %c0_7], %7 {strides = array<i32>} : memref<32x128xf32, #tpu.memory_space<vmem>>, vector<32x128xf32>,
    %c0_i32_8 = arith.constant 0 : i32
    %9 = arith.cmpi eq, %arg2, %c0_i32_8 : i32
    %10 = arith.extui %9 : i1 to i32
    %c0_i32_9 = arith.constant 0 : i32
    %11 = arith.cmpi ne, %10, %c0_i32_9 : i32
    scf.if %11 {
      %c0_10 = arith.constant 0 : index
      %c0_11 = arith.constant 0 : index
      %12 = vector.load %arg7[%c0_10, %c0_11] : memref<32x128xf32, #tpu.memory_space<vmem>>, vector<32x128xf32>
      %c0_12 = arith.constant 0 : index
      %c0_13 = arith.constant 0 : index
      %13 = vector.load %arg5[%c0_12, %c0_13] : memref<1x128xf32, #tpu.memory_space<vmem>>, vector<1x128xf32>
      %14 = vector.broadcast %13 : vector<1x128xf32> to vector<32x128xf32>
      %15 = arith.addf %12, %14 : vector<32x128xf32>
      %cst_14 = arith.constant 0.000000e+00 : f32
      %16 = vector.broadcast %cst_14 : f32 to vector<32x128xf32>
      %17 = arith.cmpf ogt, %15, %16 : vector<32x128xf32>
      %cst_15 = arith.constant 2.000000e-01 : f32
      %18 = vector.broadcast %cst_15 : f32 to vector<32x128xf32>
      %19 = arith.mulf %18, %15 : vector<32x128xf32>
      %20 = arith.select %17, %15, %19 : vector<32x128xi1>, vector<32x128xf32>
      %21 = arith.truncf %20 : vector<32x128xf32> to vector<32x128xbf16>
      %c0_16 = arith.constant 0 : index
      %c0_17 = arith.constant 0 : index
      %22 = vector.load %arg6[%c0_16, %c0_17] : memref<32x128xbf16, #tpu.memory_space<vmem>>, vector<32x128xbf16>
      tpu.vector_store %arg6[%c0_16, %c0_17], %21 {strides = array<i32>} : memref<32x128xbf16, #tpu.memory_space<vmem>>, vector<32x128xbf16>,
    } else {
    }
    return
  }
  func.func @transform_0(%arg0: i32, %arg1: i32, %arg2: i32) -> (i32, i32) {
    %c0_i32 = arith.constant 0 : i32
    return %arg0, %arg2 : i32, i32
  }
  func.func @transform_1(%arg0: i32, %arg1: i32, %arg2: i32) -> (i32, i32) {
    %c0_i32 = arith.constant 0 : i32
    return %arg2, %arg1 : i32, i32
  }
  func.func @transform_2(%arg0: i32, %arg1: i32, %arg2: i32) -> (i32, i32) {
    %c0_i32 = arith.constant 0 : i32
    %c0_i32_0 = arith.constant 0 : i32
    return %c0_i32, %arg1 : i32, i32
  }
  func.func @transform_3(%arg0: i32, %arg1: i32, %arg2: i32) -> (i32, i32) {
    %c0_i32 = arith.constant 0 : i32
    return %arg0, %arg1 : i32, i32
  }
}

</mosaic_0001>

<llo_original>
// kernel: tpu_custom_call.1
$region0: #{tpu_custom_call.1}
  #allocation0 [shape = 'u32[]', space=smem, size = 0x4, offset = 0x4, fixed_abs, tag = 'smem constant byte address 0x4 - core index']
  #allocation1 [shape = 'u32[144,128]{1,0:T(1,128)}', space=vmem, size = 0x12000, scoped, tag = 'internal scratch']
  #allocation2 [shape = 'f32[32,128]{1,0:T(8,128)}', space=vmem, size = 0x4000, scoped, tag = 'scratch operand']
  %s0 = inlined_call_operand.hbm [shape: bf16[32,128], index: 0, kind: input, shape index: {}]
  %s1 = inlined_call_operand.hbm [shape: bf16[128,128], index: 1, kind: input, shape index: {}]
  %s2 = inlined_call_operand.vmem [shape: f32[1,128], index: 2, kind: input, shape index: {}]
  %s3 = inlined_call_operand.hbm [shape: bf16[32,128], index: 3, kind: output, shape index: {}]
  %s4 = sld [smem:[#allocation0]]
  $region38: #{tpu_custom_call.1} parent=0
    _
  %s6 = ssub.s32 1, %s4
  %s7 = scalar_select 0, %s6, %s4
  $region1: #{tpu_custom_call.1} parent=0
    #allocation3 [shape = 'u8[8192]{0}', space=vmem, size = 0x2000, scoped, tag = 'input window, operand 0, single buffered']
    #allocation4 [shape = 's32[1]{0}', space=sflag, size = 0x4, scoped, tag = 'scoped memory for tpu_custom_call.1']
    #allocation5 [shape = 's32[1]{0}', space=sflag, size = 0x4, scoped, tag = 'scoped memory for tpu_custom_call.1']
    #allocation6 [shape = 'u8[32768]{0}', space=vmem, size = 0x8000, scoped, tag = 'input window, operand 1, single buffered']
    #allocation7 [shape = 's32[1]{0}', space=sflag, size = 0x4, scoped, tag = 'scoped memory for tpu_custom_call.1']
    #allocation8 [shape = 'u8[8192]{0}', space=vmem, size = 0x2000, scoped, tag = 'output window, operand 0, single buffered']
    %8 = vsyncpa [#allocation4], 0
    %9 = vsyncpa [#allocation7], 0
    %10 = vsyncpa [#allocation5], 0
    // Predicated region
    $region2: #{tpu_custom_call.1} parent=1 // pred_check
      _
    $region3: #{tpu_custom_call.1} parent=1 // pred_check_branch
      %12 = sbr.rel (0) target = $region5
    $region4: #{tpu_custom_call.1} parent=1 // pred_region
      %s14 = ssub.s32 256, 256
      %15 = vsyncadd [#allocation4], %s14
      %s16 = sshll.u32 [#allocation3], 4
      %s17 = int_to_ptr.vmem [resolvable:$true] %s16
      %22 = dma.hbm_to_vmem [thread:$0]  %s0, 256, %s17, [#allocation4], 64, 64, 4
    $region5: #{tpu_custom_call.1} parent=1 // pred_fallthru
      _
    // Predicated region
    $region6: #{tpu_custom_call.1} parent=1 // pred_check
      _
    $region7: #{tpu_custom_call.1} parent=1 // pred_check_branch
      %24 = sbr.rel (0) target = $region9
    $region8: #{tpu_custom_call.1} parent=1 // pred_region
      %s26 = ssub.s32 1024, 1024
      %27 = vsyncadd [#allocation7], %s26
      %s28 = sshll.u32 [#allocation6], 4
      %s29 = int_to_ptr.vmem [resolvable:$true] %s28
      %34 = dma.hbm_to_vmem [thread:$0]  %s1, 1024, %s29, [#allocation7], 64, 64, 4
    $region9: #{tpu_custom_call.1} parent=1 // pred_fallthru
      _
    // Predicated region
    $region10: #{tpu_custom_call.1} parent=1 // pred_check
      _
    $region11: #{tpu_custom_call.1} parent=1 // pred_check_branch
      %36 = sbr.rel (0) target = $region13
    $region12: #{tpu_custom_call.1} parent=1 // pred_region
      _
    $region13: #{tpu_custom_call.1} parent=1 // pred_fallthru
      _
    // Predicated region
    $region14: #{tpu_custom_call.1} parent=1 // pred_check
      _
    $region15: #{tpu_custom_call.1} parent=1 // pred_check_branch
      %38 = sbr.rel (0) target = $region17
    $region16: #{tpu_custom_call.1} parent=1 // pred_region
      %39 = dma.done [#allocation4], 256
    $region17: #{tpu_custom_call.1} parent=1 // pred_fallthru
      _
    // Predicated region
    $region18: #{tpu_custom_call.1} parent=1 // pred_check
      _
    $region19: #{tpu_custom_call.1} parent=1 // pred_check_branch
      %41 = sbr.rel (0) target = $region21
    $region20: #{tpu_custom_call.1} parent=1 // pred_region
      %42 = dma.done [#allocation7], 1024
    $region21: #{tpu_custom_call.1} parent=1 // pred_fallthru
      _
    %p44 = scmp.eq.s32.totalorder 0, 0
    // Predicated region
    $region22: #{tpu_custom_call.1} parent=1 // pred_check
      %p45 = pneg %p44
    $region23: #{tpu_custom_call.1} parent=1 // pred_check_branch
      %47 = sbr.rel (%p45) target = $region25
    $region24: #{tpu_custom_call.1} parent=1 // pred_region
      %48 = vst [vmem:[#allocation2] sm:$0xff] 0.0
      %49 = vst [vmem:[#allocation2 + $0x8] sm:$0xff] 0.0
      %50 = vst [vmem:[#allocation2 + $0x10] sm:$0xff] 0.0
      %51 = vst [vmem:[#allocation2 + $0x18] sm:$0xff] 0.0
    $region25: #{tpu_custom_call.1} parent=1 // pred_fallthru
      _
    %v52 = vld [vmem:[#allocation2] sm:$0xff]
    %v53 = vld [vmem:[#allocation2 + $0x8] sm:$0xff]
    %v54 = vld [vmem:[#allocation2 + $0x10] sm:$0xff]
    %v55 = vld [vmem:[#allocation2 + $0x18] sm:$0xff]
    %v56 = vld [vmem:[#allocation3] sm:$0xf]
    %v57 = vld [vmem:[#allocation3 + $0x4] sm:$0xf]
    %v58 = vld [vmem:[#allocation3 + $0x8] sm:$0xf]
    %v59 = vld [vmem:[#allocation3 + $0xc] sm:$0xf]
    %v60 = vld [vmem:[#allocation6] sm:$0xf]
    %v61 = vld [vmem:[#allocation6 + $0x4] sm:$0xf]
    %v62 = vld [vmem:[#allocation6 + $0x8] sm:$0xf]
    %v63 = vld [vmem:[#allocation6 + $0xc] sm:$0xf]
    %v64 = vld [vmem:[#allocation6 + $0x10] sm:$0xf]
    %v65 = vld [vmem:[#allocation6 + $0x14] sm:$0xf]
    %v66 = vld [vmem:[#allocation6 + $0x18] sm:$0xf]
    %v67 = vld [vmem:[#allocation6 + $0x1c] sm:$0xf]
    %v68 = vld [vmem:[#allocation6 + $0x20] sm:$0xf]
    %v69 = vld [vmem:[#allocation6 + $0x24] sm:$0xf]
    %v70 = vld [vmem:[#allocation6 + $0x28] sm:$0xf]
    %v71 = vld [vmem:[#allocation6 + $0x2c] sm:$0xf]
    %v72 = vld [vmem:[#allocation6 + $0x30] sm:$0xf]
    %v73 = vld [vmem:[#allocation6 + $0x34] sm:$0xf]
    %v74 = vld [vmem:[#allocation6 + $0x38] sm:$0xf]
    %v75 = vld [vmem:[#allocation6 + $0x3c] sm:$0xf]
    %v80 = vunpack.c.l.b16 %v56
    %v81 = vunpack.c.l.b16 %v57
    %v82 = vunpack.c.l.b16 %v58
    %v83 = vunpack.c.l.b16 %v59
    %v84 = vpack.c.b16 %v81, %v80
    %v85 = vpack.c.b16 %v83, %v82
    %v104 = vunpack.c.l.b16 %v60
    %v105 = vunpack.c.l.b16 %v61
    %v106 = vunpack.c.l.b16 %v62
    %v107 = vunpack.c.l.b16 %v63
    %v108 = vunpack.c.l.b16 %v64
    %v109 = vunpack.c.l.b16 %v65
    %v110 = vunpack.c.l.b16 %v66
    %v111 = vunpack.c.l.b16 %v67
    %v112 = vunpack.c.l.b16 %v68
    %v113 = vunpack.c.l.b16 %v69
    %v114 = vunpack.c.l.b16 %v70
    %v115 = vunpack.c.l.b16 %v71
    %v116 = vunpack.c.l.b16 %v72
    %v117 = vunpack.c.l.b16 %v73
    %v118 = vunpack.c.l.b16 %v74
    %v119 = vunpack.c.l.b16 %v75
    %v120 = vpack.c.b16 %v105, %v104
    %v121 = vpack.c.b16 %v107, %v106
    %v122 = vpack.c.b16 %v109, %v108
    %v123 = vpack.c.b16 %v111, %v110
    %v124 = vpack.c.b16 %v113, %v112
    %v125 = vpack.c.b16 %v115, %v114
    %v126 = vpack.c.b16 %v117, %v116
    %v127 = vpack.c.b16 %v119, %v118
    %136 = vmatprep.subr.bf16.mxu0 0
    %137 = vmatpush1.bf16.msra.mxu0 %v120
    %138 = vmatprep.subr.bf16.mxu0 0
    %139 = vmatpush1.bf16.msra.mxu0 %v121
    %140 = vmatprep.subr.bf16.mxu0 0
    %141 = vmatpush1.bf16.msra.mxu0 %v122
    %142 = vmatprep.subr.bf16.mxu0 0
    %143 = vmatpush1.bf16.msra.mxu0 %v123
    %144 = vmatprep.subr.bf16.mxu0 0
    %145 = vmatpush1.bf16.msra.mxu0 %v124
    %146 = vmatprep.subr.bf16.mxu0 0
    %147 = vmatpush1.bf16.msra.mxu0 %v125
    %148 = vmatprep.subr.bf16.mxu0 0
    %149 = vmatpush1.bf16.msra.mxu0 %v126
    %150 = vmatprep.subr.bf16.mxu0 0
    %151 = vmatpush1.bf16.msra.mxu0 %v127
    %152 = vmatprep.subr.bf16.mxu0 0
    %153 = vmatpush1.bf16.msra.mxu0 0
    %154 = vmatprep.subr.bf16.mxu0 0
    %155 = vmatpush1.bf16.msra.mxu0 0
    %156 = vmatprep.subr.bf16.mxu0 0
    %157 = vmatpush1.bf16.msra.mxu0 0
    %158 = vmatprep.subr.bf16.mxu0 0
    %159 = vmatpush1.bf16.msra.mxu0 0
    %160 = vmatprep.subr.bf16.mxu0 0
    %161 = vmatpush1.bf16.msra.mxu0 0
    %162 = vmatprep.subr.bf16.mxu0 0
    %163 = vmatpush1.bf16.msra.mxu0 0
    %164 = vmatprep.subr.bf16.mxu0 0
    %165 = vmatpush1.bf16.msra.mxu0 0
    %166 = vmatprep.subr.bf16.mxu0 0
    %167 = vmatpush1.bf16.msra.mxu0 0
    %168 = vmatprep.mubr.bf16.mxu0 0
    %169 = vmatmul.mubr.bf16.gmra.mrb[0].mxu0 %v84
    %v170 = vpop.f32.mrb[0].mxu0
    %v171 = vadd.f32 0.0, %v170
    %v172 = vpop.f32.mrb[0].mxu0
    %v173 = vpop.f32.mrb[0].mxu0
    %v174 = vadd.f32 0.0, %v173
    %v175 = vpop.f32.mrb[0].mxu0
    %176 = vmatprep.mubr.bf16.mxu0 0
    %177 = vmatmul.mubr.bf16.gmra.mrb[0].mxu0 %v85
    %v178 = vpop.f32.mrb[0].mxu0
    %v179 = vadd.f32 0.0, %v178
    %v180 = vpop.f32.mrb[0].mxu0
    %v181 = vpop.f32.mrb[0].mxu0
    %v182 = vadd.f32 0.0, %v181
    %v183 = vpop.f32.mrb[0].mxu0
    %184 = vdwg.mxu0
    %v185 = vadd.f32 %v52, %v171
    %v186 = vadd.f32 %v53, %v174
    %v187 = vadd.f32 %v54, %v179
    %v188 = vadd.f32 %v55, %v182
    %189 = vst [vmem:[#allocation2] sm:$0xff] %v185
    %190 = vst [vmem:[#allocation2 + $0x8] sm:$0xff] %v186
    %191 = vst [vmem:[#allocation2 + $0x10] sm:$0xff] %v187
    %192 = vst [vmem:[#allocation2 + $0x18] sm:$0xff] %v188
    // Predicated region
    $region26: #{tpu_custom_call.1} parent=1 // pred_check
      %p193 = pneg %p44
    $region27: #{tpu_custom_call.1} parent=1 // pred_check_branch
      %195 = sbr.rel (%p193) target = $region29
    $region28: #{tpu_custom_call.1} parent=1 // pred_region
      %v196 = vld [vmem:[#allocation2] sm:$0xff]
      %v197 = vld [vmem:[#allocation2 + $0x8] sm:$0xff]
      %v198 = vld [vmem:[#allocation2 + $0x10] sm:$0xff]
      %v199 = vld [vmem:[#allocation2 + $0x18] sm:$0xff]
      %v200 = vld [vmem:[%s2] sm:$0x1]
      %v202 = vlaneseq
      %v203 = vshrl.u32 %v202, 7
      %v204 = vsub.s32 0, %v203
      %v205 = vrot.slane %v200, %v204
      %v207 = vadd.f32 %v196, %v205
      %v208 = vadd.f32 %v197, %v205
      %v209 = vadd.f32 %v198, %v205
      %v210 = vadd.f32 %v199, %v205
      %vm211 = vcmp.gt.f32.partialorder %v207, 0.0
      %vm212 = vcmp.gt.f32.partialorder %v208, 0.0
      %vm213 = vcmp.gt.f32.partialorder %v209, 0.0
      %vm214 = vcmp.gt.f32.partialorder %v210, 0.0
      %v215 = vmul.f32 %v207, 0.2
      %v216 = vmul.f32 %v208, 0.2
      %v217 = vmul.f32 %v209, 0.2
      %v218 = vmul.f32 %v210, 0.2
      %v219 = vsel %vm211, %v207, %v215
      %v220 = vsel %vm212, %v208, %v216
      %v221 = vsel %vm213, %v209, %v217
      %v222 = vsel %vm214, %v210, %v218
      %v223 = vpack.c.bf16 %v220, %v219
      %v224 = vpack.c.bf16 %v222, %v221
      %v227 = vunpack.c.l.b16 %v223
      %v228 = vunpack.c.h.b16 %v223
      %v229 = vunpack.c.l.b16 %v224
      %v230 = vunpack.c.h.b16 %v224
      %v231 = vpack.c.b16 %v227, %v227
      %v232 = vpack.c.b16 %v228, %v228
      %v233 = vpack.c.b16 %v229, %v229
      %v234 = vpack.c.b16 %v230, %v230
      %239 = vst [vmem:[#allocation8] sm:$0xf] %v231
      %240 = vst [vmem:[#allocation8 + $0x4] sm:$0xf] %v232
      %241 = vst [vmem:[#allocation8 + $0x8] sm:$0xf] %v233
      %242 = vst [vmem:[#allocation8 + $0xc] sm:$0xf] %v234
    $region29: #{tpu_custom_call.1} parent=1 // pred_fallthru
      _
    // Predicated region
    $region30: #{tpu_custom_call.1} parent=1 // pred_check
      _
    $region31: #{tpu_custom_call.1} parent=1 // pred_check_branch
      %244 = sbr.rel (0) target = $region33
    $region32: #{tpu_custom_call.1} parent=1 // pred_region
      %s246 = ssub.s32 256, 256
      %247 = vsyncadd [#allocation5], %s246
      %s248 = sshll.u32 [#allocation8], 4
      %s249 = int_to_ptr.vmem [resolvable:$true] %s248
      %254 = dma.vmem_to_hbm [thread:$0]  %s249, 256, %s3, [#allocation5], 64, 64, 4
    $region33: #{tpu_custom_call.1} parent=1 // pred_fallthru
      _
    // Predicated region
    $region34: #{tpu_custom_call.1} parent=1 // pred_check
      _
    $region35: #{tpu_custom_call.1} parent=1 // pred_check_branch
      %256 = sbr.rel (0) target = $region37
    $region36: #{tpu_custom_call.1} parent=1 // pred_region
      %257 = dma.done [#allocation5], 256
    $region37: #{tpu_custom_call.1} parent=1 // pred_fallthru
      _
    %258 = vsyncpa [#allocation4], 1
    %259 = vsyncpa [#allocation7], 1
    %260 = vsyncpa [#allocation5], 1

</llo_original>
